<compile_context>
chip_gen: v6e
topology: v6e:2x2x1
jax: 0.10.0
libtpu: 0.0.40
codegen_flags: <defaults>
</compile_context>

<pallas_src>
import jax
import jax.numpy as jnp
from jax.experimental import pallas as pl
from jax.experimental.pallas import tpu as pltpu

B, S, D = 2, 8, 32      # batch, seq, d_model
DFF = 64                # feed-forward hidden dim
LANE = 128              # TPU lane width; DFF is zero-padded to this
N = B * S               # rows after folding batch+seq onto the sublane axis


def ffn_kernel(x_ref, w1_ref, w2_ref, bias_ref, o_ref):
    # x_ref:    (N, D)      bf16 activations, batch*seq folded into sublanes
    # w1_ref:   (D, LANE)   bf16, W1 zero-padded DFF -> 128 on its output dim
    # w2_ref:   (LANE, D)   bf16, W2 zero-padded DFF -> 128 on its input dim
    # bias_ref: (2, LANE)   f32, row 0 = b1 (zero-padded), row 1 = b2 in [:D]
    # o_ref:    (N, D)      f32 output at its natural shape
    b1 = bias_ref[0:1, :]        # (1, LANE)  full-lane
    b2 = bias_ref[1:2, :D]       # (1, D)     static ref slice

    # First matmul on the MXU (bf16 operands, f32 accumulation).
    h = jnp.dot(x_ref[...], w1_ref[...], preferred_element_type=jnp.float32)
    h = jnp.maximum(h + b1, 0.0)                       # bias + ReLU in f32 (VPU)
    # TODO(synk): dropout is modeled as identity (eval mode); no RNG path implemented.

    # Second matmul: cast the activation back to bf16 for the MXU.
    y = jnp.dot(h.astype(jnp.bfloat16), w2_ref[...],
                preferred_element_type=jnp.float32)
    o_ref[...] = (y + b2).astype(o_ref.dtype)


def prepare_ffn_params(w1, b1, w2, b2):
    """One-time (init-time) packing: pad DFF -> 128 lanes and cast weights to bf16.

    w1: (D, DFF), b1: (DFF,), w2: (DFF, D), b2: (D,)
    Returns (w1_p, w2_p, bias_slab) ready to feed to the kernel on every call.
    """
    d_model, d_ff = w1.shape
    w1_p = jnp.zeros((d_model, LANE), jnp.bfloat16).at[:, :d_ff].set(
        w1.astype(jnp.bfloat16))
    w2_p = jnp.zeros((LANE, d_model), jnp.bfloat16).at[:d_ff, :].set(
        w2.astype(jnp.bfloat16))
    bias_slab = jnp.zeros((2, LANE), jnp.float32)
    bias_slab = bias_slab.at[0, :d_ff].set(b1.astype(jnp.float32))
    bias_slab = bias_slab.at[1, :d_model].set(b2.astype(jnp.float32))
    return w1_p, w2_p, bias_slab


def positionwise_feed_forward(x, w1_p, w2_p, bias_slab):
    """x: (B, S, D) float32; params from prepare_ffn_params. Returns (B, S, D) f32."""
    Bx, Sx, Dx = x.shape
    n = Bx * Sx
    x_flat = x.reshape(n, Dx).astype(jnp.bfloat16)   # fold batch+seq; bf16 MXU operand

    out = pl.pallas_call(
        ffn_kernel,
        out_shape=jax.ShapeDtypeStruct((n, Dx), jnp.float32),
        grid=(1,),                                    # single step on all generations
        in_specs=[
            pl.BlockSpec((n, Dx), lambda i: (0, 0)),       # activations (full)
            pl.BlockSpec((Dx, LANE), lambda i: (0, 0)),    # W1 padded (resident)
            pl.BlockSpec((LANE, Dx), lambda i: (0, 0)),    # W2 padded (resident)
            pl.BlockSpec((2, LANE), lambda i: (0, 0)),     # packed bias slab
        ],
        out_specs=pl.BlockSpec((n, Dx), lambda i: (0, 0)),
        cost_estimate=pl.CostEstimate(
            flops=2 * 2 * n * Dx * DFF,               # two matmuls
            transcendentals=0,
            bytes_accessed=(n * Dx * 2               # x (bf16)
                            + Dx * LANE * 2          # W1 (bf16)
                            + LANE * Dx * 2          # W2 (bf16)
                            + 2 * LANE * 4           # bias slab (f32)
                            + n * Dx * 4)),          # output (f32)
    )(x_flat, w1_p, w2_p, bias_slab)

    return out.reshape(Bx, Sx, Dx)


def reference(x, w1, b1, w2, b2):
    """Pure-JAX f32 reference of the same forward pass (dropout = identity)."""
    h = jnp.maximum(x @ w1 + b1, 0.0)
    return h @ w2 + b2


if __name__ == "__main__":
    key = jax.random.PRNGKey(0)
    kx, k1, k2, k3, k4 = jax.random.split(key, 5)
    s = 0.05
    x = jax.random.normal(kx, (B, S, D), jnp.float32)
    w1 = jax.random.normal(k1, (D, DFF), jnp.float32) * s
    b1 = jax.random.normal(k2, (DFF,), jnp.float32) * s
    w2 = jax.random.normal(k3, (DFF, D), jnp.float32) * s
    b2 = jax.random.normal(k4, (D,), jnp.float32) * s

    # One-time parameter packing (init time), reused across calls.
    w1_p, w2_p, bias_slab = prepare_ffn_params(w1, b1, w2, b2)

    out = positionwise_feed_forward(x, w1_p, w2_p, bias_slab)
    out = jax.block_until_ready(out)

    ref = reference(x, w1, b1, w2, b2)
    assert out.shape == (B, S, D)
    # bf16 MXU operands -> compare against the f32 reference with bf16-level tolerance.
    assert jnp.allclose(out, ref, rtol=2e-2, atol=2e-2), "mismatch vs reference"
    print("KERNEL_OK")
</pallas_src>

<mosaic_0001>
module attributes {stable_mosaic.version = 11 : i64} {
  func.func @ffn_kernel(%arg0: i32, %arg1: memref<16x32xbf16, #tpu.memory_space<vmem>>, %arg2: memref<32x128xbf16, #tpu.memory_space<vmem>>, %arg3: memref<128x32xbf16, #tpu.memory_space<vmem>>, %arg4: memref<2x128xf32, #tpu.memory_space<vmem>>, %arg5: memref<16x32xf32, #tpu.memory_space<vmem>>) attributes {dimension_semantics = [#tpu.dimension_semantics<arbitrary>], iteration_bounds = array<i64: 1>, scalar_prefetch = 0 : i64, scratch_operands = 0 : i64, tpu.core_type = #tpu.core_type<tc>, window_params = [{pipeline_mode = #tpu.pipeline_mode<synchronous>, transform_indices = @transform_0, window_bounds = array<i64: 16, 32>}, {pipeline_mode = #tpu.pipeline_mode<synchronous>, transform_indices = @transform_1, window_bounds = array<i64: 32, 128>}, {pipeline_mode = #tpu.pipeline_mode<synchronous>, transform_indices = @transform_2, window_bounds = array<i64: 128, 32>}, {pipeline_mode = #tpu.pipeline_mode<synchronous>, transform_indices = @transform_3, window_bounds = array<i64: 2, 128>}, {pipeline_mode = #tpu.pipeline_mode<synchronous>, transform_indices = @transform_4, window_bounds = array<i64: 16, 32>}]} {
    %c0 = arith.constant 0 : index
    %c0_0 = arith.constant 0 : index
    %0 = vector.load %arg4[%c0, %c0_0] : memref<2x128xf32, #tpu.memory_space<vmem>>, vector<1x128xf32>
    %c1 = arith.constant 1 : index
    %c0_1 = arith.constant 0 : index
    %1 = vector.load %arg4[%c1, %c0_1] : memref<2x128xf32, #tpu.memory_space<vmem>>, vector<1x32xf32>
    %c0_2 = arith.constant 0 : index
    %c0_3 = arith.constant 0 : index
    %2 = vector.load %arg1[%c0_2, %c0_3] : memref<16x32xbf16, #tpu.memory_space<vmem>>, vector<16x32xbf16>
    %c0_4 = arith.constant 0 : index
    %c0_5 = arith.constant 0 : index
    %3 = vector.load %arg2[%c0_4, %c0_5] : memref<32x128xbf16, #tpu.memory_space<vmem>>, vector<32x128xbf16>
    %cst = arith.constant dense<0.000000e+00> : vector<16x128xf32>
    %4 = tpu.matmul %2, %3, %cst {dimension_numbers = #tpu.dot_dimension_numbers<[1], [0], [0], [1], [0, 0, 1, 1], [], []>} : vector<16x32xbf16>, vector<32x128xbf16>, vector<16x128xf32> -> vector<16x128xf32>
    %5 = vector.broadcast %0 : vector<1x128xf32> to vector<16x128xf32>
    %6 = arith.addf %4, %5 : vector<16x128xf32>
    %cst_6 = arith.constant 0.000000e+00 : f32
    %7 = vector.broadcast %cst_6 : f32 to vector<16x128xf32>
    %8 = arith.maximumf %6, %7 : vector<16x128xf32>
    %9 = arith.truncf %8 : vector<16x128xf32> to vector<16x128xbf16>
    %c0_7 = arith.constant 0 : index
    %c0_8 = arith.constant 0 : index
    %10 = vector.load %arg3[%c0_7, %c0_8] : memref<128x32xbf16, #tpu.memory_space<vmem>>, vector<128x32xbf16>
    %cst_9 = arith.constant dense<0.000000e+00> : vector<16x32xf32>
    %11 = tpu.matmul %9, %10, %cst_9 {dimension_numbers = #tpu.dot_dimension_numbers<[1], [0], [0], [1], [0, 0, 1, 1], [], []>} : vector<16x128xbf16>, vector<128x32xbf16>, vector<16x32xf32> -> vector<16x32xf32>
    %12 = vector.broadcast %1 : vector<1x32xf32> to vector<16x32xf32>
    %13 = arith.addf %11, %12 : vector<16x32xf32>
    %c0_10 = arith.constant 0 : index
    %c0_11 = arith.constant 0 : index
    %14 = vector.load %arg5[%c0_10, %c0_11] : memref<16x32xf32, #tpu.memory_space<vmem>>, vector<16x32xf32>
    tpu.vector_store %arg5[%c0_10, %c0_11], %13 {strides = array<i32>} : memref<16x32xf32, #tpu.memory_space<vmem>>, vector<16x32xf32>,
    return
  }
  func.func @transform_0(%arg0: i32) -> (i32, i32) {
    %c0_i32 = arith.constant 0 : i32
    %c0_i32_0 = arith.constant 0 : i32
    %c0_i32_1 = arith.constant 0 : i32
    return %c0_i32, %c0_i32_0 : i32, i32
  }
  func.func @transform_1(%arg0: i32) -> (i32, i32) {
    %c0_i32 = arith.constant 0 : i32
    %c0_i32_0 = arith.constant 0 : i32
    %c0_i32_1 = arith.constant 0 : i32
    return %c0_i32, %c0_i32_0 : i32, i32
  }
  func.func @transform_2(%arg0: i32) -> (i32, i32) {
    %c0_i32 = arith.constant 0 : i32
    %c0_i32_0 = arith.constant 0 : i32
    %c0_i32_1 = arith.constant 0 : i32
    return %c0_i32, %c0_i32_0 : i32, i32
  }
  func.func @transform_3(%arg0: i32) -> (i32, i32) {
    %c0_i32 = arith.constant 0 : i32
    %c0_i32_0 = arith.constant 0 : i32
    %c0_i32_1 = arith.constant 0 : i32
    return %c0_i32, %c0_i32_0 : i32, i32
  }
  func.func @transform_4(%arg0: i32) -> (i32, i32) {
    %c0_i32 = arith.constant 0 : i32
    %c0_i32_0 = arith.constant 0 : i32
    %c0_i32_1 = arith.constant 0 : i32
    return %c0_i32, %c0_i32_0 : i32, i32
  }
}

</mosaic_0001>

<llo_original>
// kernel: tpu_custom_call.1
$region0: #{tpu_custom_call.1}
  #allocation0 [shape = 'u32[]', space=smem, size = 0x4, offset = 0x4, fixed_abs, tag = 'smem constant byte address 0x4 - core index']
  #allocation1 [shape = 'u32[144,128]{1,0:T(1,128)}', space=vmem, size = 0x12000, scoped, tag = 'internal scratch']
  %s0 = inlined_call_operand.vmem [shape: bf16[16,32], index: 0, kind: input, shape index: {}]
  %s1 = inlined_call_operand.vmem [shape: bf16[32,128], index: 1, kind: input, shape index: {}]
  %s2 = inlined_call_operand.vmem [shape: bf16[128,32], index: 2, kind: input, shape index: {}]
  %s3 = inlined_call_operand.vmem [shape: f32[2,128], index: 3, kind: input, shape index: {}]
  %s4 = inlined_call_operand.hbm [shape: f32[16,32], index: 4, kind: output, shape index: {}]
  %s5 = sld [smem:[#allocation0]]
  $region26: #{tpu_custom_call.1} parent=0
    _
  %s7 = ssub.s32 1, %s5
  %s8 = scalar_select 0, %s7, %s5
  $region1: #{tpu_custom_call.1} parent=0
    #allocation2 [shape = 'u8[8192]{0}', space=vmem, size = 0x2000, scoped, tag = 'output window, operand 0, single buffered']
    #allocation3 [shape = 's32[1]{0}', space=sflag, size = 0x4, scoped, tag = 'scoped memory for tpu_custom_call.1']
    %9 = vsyncpa [#allocation3], 0
    // Predicated region
    $region2: #{tpu_custom_call.1} parent=1 // pred_check
      _
    $region3: #{tpu_custom_call.1} parent=1 // pred_check_branch
      %11 = sbr.rel (0) target = $region5
    $region4: #{tpu_custom_call.1} parent=1 // pred_region
      _
    $region5: #{tpu_custom_call.1} parent=1 // pred_fallthru
      _
    // Predicated region
    $region6: #{tpu_custom_call.1} parent=1 // pred_check
      _
    $region7: #{tpu_custom_call.1} parent=1 // pred_check_branch
      %13 = sbr.rel (0) target = $region9
    $region8: #{tpu_custom_call.1} parent=1 // pred_region
      _
    $region9: #{tpu_custom_call.1} parent=1 // pred_fallthru
      _
    // Predicated region
    $region10: #{tpu_custom_call.1} parent=1 // pred_check
      _
    $region11: #{tpu_custom_call.1} parent=1 // pred_check_branch
      %15 = sbr.rel (0) target = $region13
    $region12: #{tpu_custom_call.1} parent=1 // pred_region
      _
    $region13: #{tpu_custom_call.1} parent=1 // pred_fallthru
      _
    // Predicated region
    $region14: #{tpu_custom_call.1} parent=1 // pred_check
      _
    $region15: #{tpu_custom_call.1} parent=1 // pred_check_branch
      %17 = sbr.rel (0) target = $region17
    $region16: #{tpu_custom_call.1} parent=1 // pred_region
      _
    $region17: #{tpu_custom_call.1} parent=1 // pred_fallthru
      _
    %v19 = vld [vmem:[%s3] sm:$0x1]
    %v20 = vld [vmem:[%s3 + $0x1] sm:$0x1]
    %v21 = vld [vmem:[%s0] sm:$0xf]
    %v22 = vld [vmem:[%s0 + $0x4] sm:$0xf]
    %v23 = vld [vmem:[%s1] sm:$0xf]
    %v24 = vld [vmem:[%s1 + $0x4] sm:$0xf]
    %v25 = vld [vmem:[%s1 + $0x8] sm:$0xf]
    %v26 = vld [vmem:[%s1 + $0xc] sm:$0xf]
    %v27 = vlaneseq
    %v28 = vshrl.u32 %v27, 7
    %v29 = vsub.s32 0, %v28
    %v30 = vrot.slane %v19, %v29
    %v33 = vunpack.c.l.b16 %v21
    %v34 = vunpack.c.l.b16 %v22
    %v35 = vpack.c.b16 %v34, %v33
    %v40 = vunpack.c.l.b16 %v23
    %v41 = vunpack.c.l.b16 %v24
    %v42 = vunpack.c.l.b16 %v25
    %v43 = vunpack.c.l.b16 %v26
    %v44 = vpack.c.b16 %v41, %v40
    %v45 = vpack.c.b16 %v43, %v42
    %vm48 = vcmask 261120
    %v50 = vsel %vm48, %v35, 0
    %52 = vmatprep.subr.bf16.mxu0 0
    %53 = vmatpush1.bf16.msra.mxu0 0
    %54 = vmatprep.subr.bf16.mxu0 0
    %55 = vmatpush1.bf16.msra.mxu0 0
    %56 = vmatprep.subr.bf16.mxu0 0
    %57 = vmatpush1.bf16.msra.mxu0 0
    %58 = vmatprep.subr.bf16.mxu0 0
    %59 = vmatpush1.bf16.msra.mxu0 0
    %60 = vmatprep.subr.bf16.mxu0 0
    %61 = vmatpush1.bf16.msra.mxu0 0
    %62 = vmatprep.subr.bf16.mxu0 0
    %63 = vmatpush1.bf16.msra.mxu0 0
    %64 = vmatprep.subr.bf16.mxu0 0
    %65 = vmatpush1.bf16.msra.mxu0 %v45
    %66 = vmatprep.subr.bf16.mxu0 0
    %67 = vmatpush1.bf16.msra.mxu0 %v44
    %68 = vmatprep.subr.bf16.mxu0 0
    %69 = vmatpush2.bf16.msra.mxu0 0
    %70 = vmatprep.subr.bf16.mxu0 0
    %71 = vmatpush2.bf16.msra.mxu0 0
    %72 = vmatprep.subr.bf16.mxu0 0
    %73 = vmatpush2.bf16.msra.mxu0 0
    %74 = vmatprep.subr.bf16.mxu0 0
    %75 = vmatpush2.bf16.msra.mxu0 0
    %76 = vmatprep.subr.bf16.mxu0 0
    %77 = vmatpush2.bf16.msra.mxu0 0
    %78 = vmatprep.subr.bf16.mxu0 0
    %79 = vmatpush2.bf16.msra.mxu0 0
    %80 = vmatprep.subr.bf16.mxu0 0
    %81 = vmatpush2.bf16.msra.mxu0 0
    %82 = vmatprep.subr.bf16.mxu0 0
    %83 = vmatpush2.bf16.msra.mxu0 0
    %84 = vmatprep.mubr.bf16.mxu0 0
    %85 = vmatmul.mubr.bf16.gmra.mxu0 %v50
    %v86 = vpop.f32.mrf.mxu0
    %v87 = vadd.f32 %v30, %v86
    %v88 = vpop.f32.mrf.mxu0
    %v89 = vpop.f32.mrf.mxu0
    %v90 = vadd.f32 %v30, %v89
    %v91 = vpop.f32.mrf.mxu0
    %92 = vdwg.mxu0
    %v93 = vmax.f32 %v87, 0.0
    %v94 = vmax.f32 %v90, 0.0
    %v95 = vpack.c.bf16 %v94, %v93
    %v96 = vld [vmem:[%s2] sm:$0xf]
    %v97 = vld [vmem:[%s2 + $0x4] sm:$0xf]
    %v98 = vld [vmem:[%s2 + $0x8] sm:$0xf]
    %v99 = vld [vmem:[%s2 + $0xc] sm:$0xf]
    %v100 = vld [vmem:[%s2 + $0x10] sm:$0xf]
    %v101 = vld [vmem:[%s2 + $0x14] sm:$0xf]
    %v102 = vld [vmem:[%s2 + $0x18] sm:$0xf]
    %v103 = vld [vmem:[%s2 + $0x1c] sm:$0xf]
    %v104 = vld [vmem:[%s2 + $0x20] sm:$0xf]
    %v105 = vld [vmem:[%s2 + $0x24] sm:$0xf]
    %v106 = vld [vmem:[%s2 + $0x28] sm:$0xf]
    %v107 = vld [vmem:[%s2 + $0x2c] sm:$0xf]
    %v108 = vld [vmem:[%s2 + $0x30] sm:$0xf]
    %v109 = vld [vmem:[%s2 + $0x34] sm:$0xf]
    %v110 = vld [vmem:[%s2 + $0x38] sm:$0xf]
    %v111 = vld [vmem:[%s2 + $0x3c] sm:$0xf]
    %v112 = vlaneseq
    %v113 = vshrl.u32 %v112, 7
    %v114 = vsub.s32 0, %v113
    %v115 = vrot.slane %v20, %v114
    %v132 = vunpack.c.l.b16 %v96
    %v133 = vunpack.c.l.b16 %v97
    %v134 = vunpack.c.l.b16 %v98
    %v135 = vunpack.c.l.b16 %v99
    %v136 = vunpack.c.l.b16 %v100
    %v137 = vunpack.c.l.b16 %v101
    %v138 = vunpack.c.l.b16 %v102
    %v139 = vunpack.c.l.b16 %v103
    %v140 = vunpack.c.l.b16 %v104
    %v141 = vunpack.c.l.b16 %v105
    %v142 = vunpack.c.l.b16 %v106
    %v143 = vunpack.c.l.b16 %v107
    %v144 = vunpack.c.l.b16 %v108
    %v145 = vunpack.c.l.b16 %v109
    %v146 = vunpack.c.l.b16 %v110
    %v147 = vunpack.c.l.b16 %v111
    %v148 = vpack.c.b16 %v133, %v132
    %v149 = vpack.c.b16 %v135, %v134
    %v150 = vpack.c.b16 %v137, %v136
    %v151 = vpack.c.b16 %v139, %v138
    %v152 = vpack.c.b16 %v141, %v140
    %v153 = vpack.c.b16 %v143, %v142
    %v154 = vpack.c.b16 %v145, %v144
    %v155 = vpack.c.b16 %v147, %v146
    %164 = vmatprep.subr.bf16.mxu0 0
    %165 = vmatpush1.bf16.msra.mxu0 %v155
    %166 = vmatprep.subr.bf16.mxu0 0
    %167 = vmatpush1.bf16.msra.mxu0 %v154
    %168 = vmatprep.subr.bf16.mxu0 0
    %169 = vmatpush1.bf16.msra.mxu0 %v153
    %170 = vmatprep.subr.bf16.mxu0 0
    %171 = vmatpush1.bf16.msra.mxu0 %v152
    %172 = vmatprep.subr.bf16.mxu0 0
    %173 = vmatpush1.bf16.msra.mxu0 %v151
    %174 = vmatprep.subr.bf16.mxu0 0
    %175 = vmatpush1.bf16.msra.mxu0 %v150
    %176 = vmatprep.subr.bf16.mxu0 0
    %177 = vmatpush1.bf16.msra.mxu0 %v149
    %178 = vmatprep.subr.bf16.mxu0 0
    %179 = vmatpush1.bf16.msra.mxu0 %v148
    %180 = vmatprep.subr.bf16.mxu0 0
    %181 = vmatpush2.bf16.msra.mxu0 0
    %182 = vmatprep.subr.bf16.mxu0 0
    %183 = vmatpush2.bf16.msra.mxu0 0
    %184 = vmatprep.subr.bf16.mxu0 0
    %185 = vmatpush2.bf16.msra.mxu0 0
    %186 = vmatprep.subr.bf16.mxu0 0
    %187 = vmatpush2.bf16.msra.mxu0 0
    %188 = vmatprep.subr.bf16.mxu0 0
    %189 = vmatpush2.bf16.msra.mxu0 0
    %190 = vmatprep.subr.bf16.mxu0 0
    %191 = vmatpush2.bf16.msra.mxu0 0
    %192 = vmatprep.subr.bf16.mxu0 0
    %193 = vmatpush2.bf16.msra.mxu0 0
    %194 = vmatprep.subr.bf16.mxu0 0
    %195 = vmatpush2.bf16.msra.mxu0 0
    %196 = vmatprep.mubr.bf16.mxu0 0
    %197 = vmatmul.mubr.bf16.gmra.mxu0 %v95
    %v198 = vpop.f32.mrf.mxu0
    %v199 = vadd.f32 %v115, %v198
    %v200 = vpop.f32.mrf.mxu0
    %v201 = vpop.f32.mrf.mxu0
    %v202 = vadd.f32 %v115, %v201
    %v203 = vpop.f32.mrf.mxu0
    %204 = vdwg.mxu0
    %205 = vst.msk [vmem:[#allocation2] sm:$0xff] %vm48, %v199
    %206 = vst.msk [vmem:[#allocation2 + $0x8] sm:$0xff] %vm48, %v202
    // Predicated region
    $region18: #{tpu_custom_call.1} parent=1 // pred_check
      _
    $region19: #{tpu_custom_call.1} parent=1 // pred_check_branch
      %208 = sbr.rel (0) target = $region21
    $region20: #{tpu_custom_call.1} parent=1 // pred_region
      %s210 = ssub.s32 256, 256
      %211 = vsyncadd [#allocation3], %s210
      %s212 = sshll.u32 [#allocation2], 4
      %s213 = int_to_ptr.vmem [resolvable:$true] %s212
      %218 = dma.vmem_to_hbm [thread:$0]  %s213, 256, %s4, [#allocation3], 128, 128, 8
    $region21: #{tpu_custom_call.1} parent=1 // pred_fallthru
      _
    // Predicated region
    $region22: #{tpu_custom_call.1} parent=1 // pred_check
      _
    $region23: #{tpu_custom_call.1} parent=1 // pred_check_branch
      %220 = sbr.rel (0) target = $region25
    $region24: #{tpu_custom_call.1} parent=1 // pred_region
      %221 = dma.done [#allocation3], 256
    $region25: #{tpu_custom_call.1} parent=1 // pred_fallthru
      _
    %222 = vsyncpa [#allocation3], 1

</llo_original>
